<compile_context>
chip_gen: v5e
topology: v5e:2x2
jax: 0.10.0
libtpu: 0.0.40
codegen_flags: <defaults>
</compile_context>

<pallas_src>
import jax
import jax.numpy as jnp
from jax.experimental import pallas as pl
from jax.experimental.pallas import tpu as pltpu


def _round_up(x: int, m: int) -> int:
    return ((x + m - 1) // m) * m


def _cdiv(a: int, b: int) -> int:
    return (a + b - 1) // b


def _make_kernel(wq: int, t_p: int):
    """Kernel for one (batch, flat-spatial-tile) grid point.

    Refs:
      xm_ref:   (1, Cin, t_p)     main flat-input tile (matmul dtype)
      xh_ref:   (1, Cin, halo_p)  right halo: the next halo_p flat elements
      w1_ref:   (9, Cmid, Cin)    3x3 weights, BN scale folded, tap-major (dy*3+dx)
      bias_ref: (Cmid, 1)         folded BN bias (f32)
      w2_ref:   (Ncls, Cmid)      1x1 conv weights
      o_ref:    (1, Ncls, t_p)    output tile (f32, channels-major / lane-dense)
    """
    offs = tuple(dy * wq + dx for dy in range(3) for dx in range(3))

    def kernel(xm_ref, xh_ref, w1_ref, bias_ref, w2_ref, o_ref):
        # Tile plus its right halo, resident in VMEM/vregs: (Cin, t_p + halo_p).
        x = jnp.concatenate([xm_ref[0], xh_ref[0]], axis=-1)
        # Nine shifted views of the flat input == im2col; nine accumulated MXU
        # matmuls (f32 accumulation).  The shifts are lane-offset relayouts
        # (XLU) of VMEM-resident data — no extra HBM traffic.
        # TODO(synk): if profiling shows the lane shifts (XLU) binding, split
        # the dy (input) and dx (output) shifts: 3 input shifts + 2 output
        # shifts instead of 9 input shifts.
        acc = jnp.dot(w1_ref[0], x[:, offs[0]:offs[0] + t_p],
                      preferred_element_type=jnp.float32)
        for k in range(1, 9):
            o = offs[k]
            acc = acc + jnp.dot(w1_ref[k], x[:, o:o + t_p],
                                preferred_element_type=jnp.float32)
        # Folded-BN bias + ReLU in f32 (v5e VPU has no bf16 elementwise path).
        h = jnp.maximum(acc + bias_ref[...], 0.0)
        out = jnp.dot(w2_ref[...], h.astype(w2_ref.dtype),
                      preferred_element_type=jnp.float32)
        o_ref[0] = out

    return kernel


def _vmem_params():
    """(vmem_limit_bytes, per-step tile budget) — generation aware."""
    try:
        phys = int(pltpu.get_tpu_info().vmem_capacity_bytes)
    except Exception:
        phys = 64 * 1024 * 1024          # conservative default (v7x per-TC VMEM)
    limit = min((phys * 3) // 4, 96 * 1024 * 1024)   # v5e/v6e: 96 MiB, v7x: 48 MiB
    limit = max(limit, 32 * 1024 * 1024)
    budget = limit - 4 * 1024 * 1024                 # headroom for compiler scratch
    return limit, budget


def _pick_tile(p_flat, halo_p, c_in, c_mid, n_cls, eb, vmem_budget, batch):
    """Largest flat-spatial tile (a multiple of halo_p, which is a multiple of
    128) whose full per-step VMEM footprint fits `vmem_budget`; prefers an even
    total grid-step count (v7x has 2 TensorCores)."""

    def step_bytes(t_p):
        b = 2 * c_in * (t_p + halo_p) * eb            # main + halo double buffers
        b += 2 * n_cls * t_p * 4                      # output double buffer (f32)
        b += 2 * (9 * c_mid * c_in + n_cls * c_mid) * eb + 2 * c_mid * 4  # weights
        b += c_in * (t_p + halo_p) * eb               # concatenated input value
        b += c_in * t_p * eb                          # one materialized shifted tap
        b += c_mid * t_p * 4 + c_mid * t_p * eb       # f32 accumulator + cast h
        b += n_cls * t_p * 4                          # f32 result before store
        return b

    hi = max(halo_p, min(2048, _round_up(p_flat, halo_p)))   # gains saturate ~512-2048
    cands = [t for t in range(halo_p, hi + 1, halo_p) if step_bytes(t) <= vmem_budget]
    if not cands:
        cands = [halo_p]
    best = cands[-1]
    # Prefer an even (>=2) total step count for 2-TC load balance, as long as
    # it does not shrink the tile below half of the largest feasible tile.
    for t in reversed(cands):
        steps = batch * _cdiv(p_flat, t)
        if steps >= 2 and steps % 2 == 0:
            if 2 * t >= best:
                best = t
            break
    return best


def bisenet_output_forward(x_nchw, w1_oihw, bn_gamma, bn_beta, bn_mean, bn_var,
                           w2_oihw, eps=1e-5, matmul_dtype=jnp.bfloat16):
    """Fused Pallas forward.  x_nchw: (N, Cin, H, W) f32 (PyTorch layout).
    Returns (N, Ncls, H, W) f32."""
    N, Cin, H, W = x_nchw.shape
    Cmid = w1_oihw.shape[0]
    Ncls = w2_oihw.shape[0]

    Wq = W + 2                              # conv-padded width
    P = H * Wq                              # "virtual" flat output length
    halo_p = _round_up(2 * Wq + 2, 128)     # max tap offset, rounded to lanes

    # ---- BN folding + weight packing (tiny, plain JAX) ----
    inv_std = 1.0 / jnp.sqrt(bn_var.astype(jnp.float32) + eps)
    scale = bn_gamma.astype(jnp.float32) * inv_std                    # (Cmid,)
    bias = bn_beta.astype(jnp.float32) - bn_mean.astype(jnp.float32) * scale
    bias_col = bias.reshape(Cmid, 1)                                  # f32
    # W1: (Cmid, Cin, 3, 3) -> tap-major (9, Cmid, Cin); fold BN scale on Cmid.
    w1_taps = jnp.transpose(w1_oihw.astype(jnp.float32), (2, 3, 0, 1)).reshape(9, Cmid, Cin)
    w1_taps = (w1_taps * scale[None, :, None]).astype(matmul_dtype)
    w2_mat = w2_oihw.reshape(Ncls, Cmid).astype(matmul_dtype)

    # ---- tile selection (VMEM- and generation-aware, even grid for v7x) ----
    eb = jnp.dtype(matmul_dtype).itemsize
    vmem_limit, vmem_budget = _vmem_params()
    tP = _pick_tile(P, halo_p, Cin, Cmid, Ncls, eb, vmem_budget, N)
    Pp = _round_up(P, tP)
    nT = Pp // tP
    Lp = Pp + halo_p                        # flat input length incl. last-tile halo

    # ---- 1x-traffic input prep: conv pad, flatten, zero-pad the flat tail ----
    x_pad = jnp.pad(x_nchw.astype(matmul_dtype), ((0, 0), (0, 0), (1, 1), (1, 1)))
    xf = x_pad.reshape(N, Cin, (H + 2) * Wq)
    xf = jnp.pad(xf, ((0, 0), (0, 0), (0, Lp - (H + 2) * Wq)))        # (N, Cin, Lp)

    kernel = _make_kernel(Wq, tP)
    out_flat = pl.pallas_call(
        kernel,
        out_shape=jax.ShapeDtypeStruct((N, Ncls, Pp), jnp.float32),
        grid_spec=pltpu.PrefetchScalarGridSpec(
            num_scalar_prefetch=0,
            grid=(N, nT),
            in_specs=[
                # main flat-input tile: elements [t*tP, (t+1)*tP)
                pl.BlockSpec((1, Cin, tP), lambda n, t: (n, 0, t)),
                # halo: elements [(t+1)*tP, (t+1)*tP + halo_p)  (halo_p | tP)
                pl.BlockSpec((1, Cin, halo_p),
                             lambda n, t: (n, 0, (t + 1) * (tP // halo_p))),
                pl.BlockSpec((9, Cmid, Cin), lambda n, t: (0, 0, 0)),
                pl.BlockSpec((Cmid, 1), lambda n, t: (0, 0)),
                pl.BlockSpec((Ncls, Cmid), lambda n, t: (0, 0)),
            ],
            out_specs=pl.BlockSpec((1, Ncls, tP), lambda n, t: (n, 0, t)),
        ),
        compiler_params=pltpu.CompilerParams(
            dimension_semantics=("parallel", "parallel"),
            vmem_limit_bytes=int(vmem_limit)),
    )(xf, xf, w1_taps, bias_col, w2_mat)

    # Valid outputs live at flat positions h*Wq + w, w < W; drop the 2 garbage
    # columns produced by the flat-shift trick (tiny, Ncls channels only).
    y = out_flat[:, :, :H * Wq].reshape(N, Ncls, H, Wq)
    return y[:, :, :, :W]


def _reference_forward(x_nchw, w1_oihw, bn_gamma, bn_beta, bn_mean, bn_var,
                       w2_oihw, eps=1e-5):
    """Plain-JAX f32 reference (XLA convs) for correctness check."""
    y = jax.lax.conv_general_dilated(
        x_nchw, w1_oihw, window_strides=(1, 1), padding=((1, 1), (1, 1)),
        dimension_numbers=("NCHW", "OIHW", "NCHW"))
    s = bn_gamma / jnp.sqrt(bn_var + eps)
    b = bn_beta - bn_mean * s
    y = jnp.maximum(y * s[None, :, None, None] + b[None, :, None, None], 0.0)
    y = jax.lax.conv_general_dilated(
        y, w2_oihw, window_strides=(1, 1), padding=((0, 0), (0, 0)),
        dimension_numbers=("NCHW", "OIHW", "NCHW"))
    return y


if __name__ == "__main__":
    # Small shapes consistent with BiSeNetOutput(in_chan, mid_chan, n_classes).
    N, Cin, H, W = 2, 4, 16, 16
    Cmid, Ncls = 8, 4

    key = jax.random.PRNGKey(0)
    k_x, k_w1, k_w2 = jax.random.split(key, 3)

    x = jax.random.normal(k_x, (N, Cin, H, W), dtype=jnp.float32)

    # kaiming_normal_ with a=1: gain = sqrt(2/(1+a^2)) = 1, std = 1/sqrt(fan_in)
    fan_in1 = Cin * 3 * 3
    w1 = jax.random.normal(k_w1, (Cmid, Cin, 3, 3), jnp.float32) / jnp.sqrt(fan_in1)
    fan_in2 = Cmid * 1 * 1
    w2 = jax.random.normal(k_w2, (Ncls, Cmid, 1, 1), jnp.float32) / jnp.sqrt(fan_in2)

    # BatchNorm2d params (inference semantics; freshly-initialized stats).
    bn_gamma = jnp.ones((Cmid,), jnp.float32)
    bn_beta = jnp.zeros((Cmid,), jnp.float32)
    bn_mean = jnp.zeros((Cmid,), jnp.float32)
    bn_var = jnp.ones((Cmid,), jnp.float32)
    # TODO(synk): PyTorch training-mode BN would use batch statistics; the
    # inference (running-stats) form is implemented here.

    ref = _reference_forward(x, w1, bn_gamma, bn_beta, bn_mean, bn_var, w2)

    # Strict correctness check: same kernel with f32 matmul operands.
    out_f32 = bisenet_output_forward(x, w1, bn_gamma, bn_beta, bn_mean, bn_var,
                                     w2, matmul_dtype=jnp.float32)
    out_f32 = jax.block_until_ready(out_f32)
    assert out_f32.shape == (N, Ncls, H, W), out_f32.shape
    assert jnp.allclose(out_f32, ref, atol=1e-4, rtol=1e-4), "f32 path mismatch"

    # Fast path: bf16 matmul operands, f32 accumulation (looser tolerance is
    # purely bf16 operand rounding).
    out = bisenet_output_forward(x, w1, bn_gamma, bn_beta, bn_mean, bn_var, w2)
    out = jax.block_until_ready(out)
    assert out.shape == (N, Ncls, H, W), out.shape
    assert jnp.allclose(out, ref, atol=7e-2, rtol=7e-2), "bf16 path mismatch"

    print("KERNEL_OK")
</pallas_src>

<mosaic_0001>
module attributes {stable_mosaic.version = 11 : i64} {
  func.func @kernel(%arg0: i32, %arg1: i32, %arg2: memref<1x4x384xf32, #tpu.memory_space<vmem>>, %arg3: memref<1x4x128xf32, #tpu.memory_space<vmem>>, %arg4: memref<9x8x4xf32, #tpu.memory_space<vmem>>, %arg5: memref<8x1xf32, #tpu.memory_space<vmem>>, %arg6: memref<4x8xf32, #tpu.memory_space<vmem>>, %arg7: memref<1x4x384xf32, #tpu.memory_space<vmem>>) attributes {dimension_semantics = [#tpu.dimension_semantics<parallel>, #tpu.dimension_semantics<parallel>], iteration_bounds = array<i64: 2, 1>, scalar_prefetch = 0 : i64, scratch_operands = 0 : i64, tpu.core_type = #tpu.core_type<tc>, window_params = [{transform_indices = @transform_0, window_bounds = array<i64: 1, 4, 384>}, {transform_indices = @transform_1, window_bounds = array<i64: 1, 4, 128>}, {pipeline_mode = #tpu.pipeline_mode<synchronous>, transform_indices = @transform_2, window_bounds = array<i64: 9, 8, 4>}, {pipeline_mode = #tpu.pipeline_mode<synchronous>, transform_indices = @transform_3, window_bounds = array<i64: 8, 1>}, {pipeline_mode = #tpu.pipeline_mode<synchronous>, transform_indices = @transform_4, window_bounds = array<i64: 4, 8>}, {transform_indices = @transform_5, window_bounds = array<i64: 1, 4, 384>}]} {
    %c0 = arith.constant 0 : index
    %c0_0 = arith.constant 0 : index
    %c0_1 = arith.constant 0 : index
    %0 = vector.load %arg2[%c0, %c0_0, %c0_1] : memref<1x4x384xf32, #tpu.memory_space<vmem>>, vector<1x4x384xf32>
    %1 = vector.shape_cast %0 : vector<1x4x384xf32> to vector<4x384xf32>
    %c0_2 = arith.constant 0 : index
    %c0_3 = arith.constant 0 : index
    %c0_4 = arith.constant 0 : index
    %2 = vector.load %arg3[%c0_2, %c0_3, %c0_4] : memref<1x4x128xf32, #tpu.memory_space<vmem>>, vector<1x4x128xf32>
    %3 = vector.shape_cast %2 : vector<1x4x128xf32> to vector<4x128xf32>
    %4 = tpu.concatenate %1, %3 in 1 : vector<4x384xf32>, vector<4x128xf32> -> vector<4x512xf32>
    %c0_5 = arith.constant 0 : index
    %c0_6 = arith.constant 0 : index
    %c0_7 = arith.constant 0 : index
    %5 = vector.load %arg4[%c0_5, %c0_6, %c0_7] : memref<9x8x4xf32, #tpu.memory_space<vmem>>, vector<1x8x4xf32>
    %6 = vector.shape_cast %5 : vector<1x8x4xf32> to vector<8x4xf32>
    %7 = vector.extract_strided_slice %4 {offsets = [0, 0], sizes = [4, 384], strides = [1, 1]} : vector<4x512xf32> to vector<4x384xf32>
    %cst = arith.constant dense<0.000000e+00> : vector<8x384xf32>
    %8 = tpu.matmul %6, %7, %cst {dimension_numbers = #tpu.dot_dimension_numbers<[1], [0], [0], [1], [0, 0, 1, 1], [], []>} : vector<8x4xf32>, vector<4x384xf32>, vector<8x384xf32> -> vector<8x384xf32>
    %c1 = arith.constant 1 : index
    %c0_8 = arith.constant 0 : index
    %c0_9 = arith.constant 0 : index
    %9 = vector.load %arg4[%c1, %c0_8, %c0_9] : memref<9x8x4xf32, #tpu.memory_space<vmem>>, vector<1x8x4xf32>
    %10 = vector.shape_cast %9 : vector<1x8x4xf32> to vector<8x4xf32>
    %11 = vector.extract_strided_slice %4 {offsets = [0, 1], sizes = [4, 384], strides = [1, 1]} : vector<4x512xf32> to vector<4x384xf32>
    %cst_10 = arith.constant dense<0.000000e+00> : vector<8x384xf32>
    %12 = tpu.matmul %10, %11, %cst_10 {dimension_numbers = #tpu.dot_dimension_numbers<[1], [0], [0], [1], [0, 0, 1, 1], [], []>} : vector<8x4xf32>, vector<4x384xf32>, vector<8x384xf32> -> vector<8x384xf32>
    %13 = arith.addf %8, %12 : vector<8x384xf32>
    %c2 = arith.constant 2 : index
    %c0_11 = arith.constant 0 : index
    %c0_12 = arith.constant 0 : index
    %14 = vector.load %arg4[%c2, %c0_11, %c0_12] : memref<9x8x4xf32, #tpu.memory_space<vmem>>, vector<1x8x4xf32>
    %15 = vector.shape_cast %14 : vector<1x8x4xf32> to vector<8x4xf32>
    %16 = vector.extract_strided_slice %4 {offsets = [0, 2], sizes = [4, 384], strides = [1, 1]} : vector<4x512xf32> to vector<4x384xf32>
    %cst_13 = arith.constant dense<0.000000e+00> : vector<8x384xf32>
    %17 = tpu.matmul %15, %16, %cst_13 {dimension_numbers = #tpu.dot_dimension_numbers<[1], [0], [0], [1], [0, 0, 1, 1], [], []>} : vector<8x4xf32>, vector<4x384xf32>, vector<8x384xf32> -> vector<8x384xf32>
    %18 = arith.addf %13, %17 : vector<8x384xf32>
    %c3 = arith.constant 3 : index
    %c0_14 = arith.constant 0 : index
    %c0_15 = arith.constant 0 : index
    %19 = vector.load %arg4[%c3, %c0_14, %c0_15] : memref<9x8x4xf32, #tpu.memory_space<vmem>>, vector<1x8x4xf32>
    %20 = vector.shape_cast %19 : vector<1x8x4xf32> to vector<8x4xf32>
    %21 = vector.extract_strided_slice %4 {offsets = [0, 18], sizes = [4, 384], strides = [1, 1]} : vector<4x512xf32> to vector<4x384xf32>
    %cst_16 = arith.constant dense<0.000000e+00> : vector<8x384xf32>
    %22 = tpu.matmul %20, %21, %cst_16 {dimension_numbers = #tpu.dot_dimension_numbers<[1], [0], [0], [1], [0, 0, 1, 1], [], []>} : vector<8x4xf32>, vector<4x384xf32>, vector<8x384xf32> -> vector<8x384xf32>
    %23 = arith.addf %18, %22 : vector<8x384xf32>
    %c4 = arith.constant 4 : index
    %c0_17 = arith.constant 0 : index
    %c0_18 = arith.constant 0 : index
    %24 = vector.load %arg4[%c4, %c0_17, %c0_18] : memref<9x8x4xf32, #tpu.memory_space<vmem>>, vector<1x8x4xf32>
    %25 = vector.shape_cast %24 : vector<1x8x4xf32> to vector<8x4xf32>
    %26 = vector.extract_strided_slice %4 {offsets = [0, 19], sizes = [4, 384], strides = [1, 1]} : vector<4x512xf32> to vector<4x384xf32>
    %cst_19 = arith.constant dense<0.000000e+00> : vector<8x384xf32>
    %27 = tpu.matmul %25, %26, %cst_19 {dimension_numbers = #tpu.dot_dimension_numbers<[1], [0], [0], [1], [0, 0, 1, 1], [], []>} : vector<8x4xf32>, vector<4x384xf32>, vector<8x384xf32> -> vector<8x384xf32>
    %28 = arith.addf %23, %27 : vector<8x384xf32>
    %c5 = arith.constant 5 : index
    %c0_20 = arith.constant 0 : index
    %c0_21 = arith.constant 0 : index
    %29 = vector.load %arg4[%c5, %c0_20, %c0_21] : memref<9x8x4xf32, #tpu.memory_space<vmem>>, vector<1x8x4xf32>
    %30 = vector.shape_cast %29 : vector<1x8x4xf32> to vector<8x4xf32>
    %31 = vector.extract_strided_slice %4 {offsets = [0, 20], sizes = [4, 384], strides = [1, 1]} : vector<4x512xf32> to vector<4x384xf32>
    %cst_22 = arith.constant dense<0.000000e+00> : vector<8x384xf32>
    %32 = tpu.matmul %30, %31, %cst_22 {dimension_numbers = #tpu.dot_dimension_numbers<[1], [0], [0], [1], [0, 0, 1, 1], [], []>} : vector<8x4xf32>, vector<4x384xf32>, vector<8x384xf32> -> vector<8x384xf32>
    %33 = arith.addf %28, %32 : vector<8x384xf32>
    %c6 = arith.constant 6 : index
    %c0_23 = arith.constant 0 : index
    %c0_24 = arith.constant 0 : index
    %34 = vector.load %arg4[%c6, %c0_23, %c0_24] : memref<9x8x4xf32, #tpu.memory_space<vmem>>, vector<1x8x4xf32>
    %35 = vector.shape_cast %34 : vector<1x8x4xf32> to vector<8x4xf32>
    %36 = vector.extract_strided_slice %4 {offsets = [0, 36], sizes = [4, 384], strides = [1, 1]} : vector<4x512xf32> to vector<4x384xf32>
    %cst_25 = arith.constant dense<0.000000e+00> : vector<8x384xf32>
    %37 = tpu.matmul %35, %36, %cst_25 {dimension_numbers = #tpu.dot_dimension_numbers<[1], [0], [0], [1], [0, 0, 1, 1], [], []>} : vector<8x4xf32>, vector<4x384xf32>, vector<8x384xf32> -> vector<8x384xf32>
    %38 = arith.addf %33, %37 : vector<8x384xf32>
    %c7 = arith.constant 7 : index
    %c0_26 = arith.constant 0 : index
    %c0_27 = arith.constant 0 : index
    %39 = vector.load %arg4[%c7, %c0_26, %c0_27] : memref<9x8x4xf32, #tpu.memory_space<vmem>>, vector<1x8x4xf32>
    %40 = vector.shape_cast %39 : vector<1x8x4xf32> to vector<8x4xf32>
    %41 = vector.extract_strided_slice %4 {offsets = [0, 37], sizes = [4, 384], strides = [1, 1]} : vector<4x512xf32> to vector<4x384xf32>
    %cst_28 = arith.constant dense<0.000000e+00> : vector<8x384xf32>
    %42 = tpu.matmul %40, %41, %cst_28 {dimension_numbers = #tpu.dot_dimension_numbers<[1], [0], [0], [1], [0, 0, 1, 1], [], []>} : vector<8x4xf32>, vector<4x384xf32>, vector<8x384xf32> -> vector<8x384xf32>
    %43 = arith.addf %38, %42 : vector<8x384xf32>
    %c8 = arith.constant 8 : index
    %c0_29 = arith.constant 0 : index
    %c0_30 = arith.constant 0 : index
    %44 = vector.load %arg4[%c8, %c0_29, %c0_30] : memref<9x8x4xf32, #tpu.memory_space<vmem>>, vector<1x8x4xf32>
    %45 = vector.shape_cast %44 : vector<1x8x4xf32> to vector<8x4xf32>
    %46 = vector.extract_strided_slice %4 {offsets = [0, 38], sizes = [4, 384], strides = [1, 1]} : vector<4x512xf32> to vector<4x384xf32>
    %cst_31 = arith.constant dense<0.000000e+00> : vector<8x384xf32>
    %47 = tpu.matmul %45, %46, %cst_31 {dimension_numbers = #tpu.dot_dimension_numbers<[1], [0], [0], [1], [0, 0, 1, 1], [], []>} : vector<8x4xf32>, vector<4x384xf32>, vector<8x384xf32> -> vector<8x384xf32>
    %48 = arith.addf %43, %47 : vector<8x384xf32>
    %c0_32 = arith.constant 0 : index
    %c0_33 = arith.constant 0 : index
    %49 = vector.load %arg5[%c0_32, %c0_33] : memref<8x1xf32, #tpu.memory_space<vmem>>, vector<8x1xf32>
    %50 = vector.broadcast %49 : vector<8x1xf32> to vector<8x384xf32>
    %51 = arith.addf %48, %50 : vector<8x384xf32>
    %cst_34 = arith.constant 0.000000e+00 : f32
    %52 = vector.broadcast %cst_34 : f32 to vector<8x384xf32>
    %53 = arith.maximumf %51, %52 : vector<8x384xf32>
    %c0_35 = arith.constant 0 : index
    %c0_36 = arith.constant 0 : index
    %54 = vector.load %arg6[%c0_35, %c0_36] : memref<4x8xf32, #tpu.memory_space<vmem>>, vector<4x8xf32>
    %cst_37 = arith.constant dense<0.000000e+00> : vector<4x384xf32>
    %55 = tpu.matmul %54, %53, %cst_37 {dimension_numbers = #tpu.dot_dimension_numbers<[1], [0], [0], [1], [0, 0, 1, 1], [], []>} : vector<4x8xf32>, vector<8x384xf32>, vector<4x384xf32> -> vector<4x384xf32>
    %c0_38 = arith.constant 0 : index
    %c0_39 = arith.constant 0 : index
    %c0_40 = arith.constant 0 : index
    %56 = vector.load %arg7[%c0_38, %c0_39, %c0_40] : memref<1x4x384xf32, #tpu.memory_space<vmem>>, vector<1x4x384xf32>
    %57 = vector.shape_cast %56 : vector<1x4x384xf32> to vector<4x384xf32>
    %58 = vector.shape_cast %55 : vector<4x384xf32> to vector<1x4x384xf32>
    tpu.vector_store %arg7[%c0_38, %c0_39, %c0_40], %58 {strides = array<i32>} : memref<1x4x384xf32, #tpu.memory_space<vmem>>, vector<1x4x384xf32>,
    return
  }
  func.func @transform_0(%arg0: i32, %arg1: i32) -> (i32, i32, i32) {
    %c0_i32 = arith.constant 0 : i32
    %c0_i32_0 = arith.constant 0 : i32
    return %arg0, %c0_i32, %arg1 : i32, i32, i32
  }
  func.func @transform_1(%arg0: i32, %arg1: i32) -> (i32, i32, i32) {
    %c1_i32 = arith.constant 1 : i32
    %0 = arith.addi %arg1, %c1_i32 : i32
    %c3_i32 = arith.constant 3 : i32
    %1 = arith.muli %0, %c3_i32 : i32
    %c0_i32 = arith.constant 0 : i32
    %c0_i32_0 = arith.constant 0 : i32
    return %arg0, %c0_i32, %1 : i32, i32, i32
  }
  func.func @transform_2(%arg0: i32, %arg1: i32) -> (i32, i32, i32) {
    %c0_i32 = arith.constant 0 : i32
    %c0_i32_0 = arith.constant 0 : i32
    %c0_i32_1 = arith.constant 0 : i32
    %c0_i32_2 = arith.constant 0 : i32
    return %c0_i32, %c0_i32_0, %c0_i32_1 : i32, i32, i32
  }
  func.func @transform_3(%arg0: i32, %arg1: i32) -> (i32, i32) {
    %c0_i32 = arith.constant 0 : i32
    %c0_i32_0 = arith.constant 0 : i32
    %c0_i32_1 = arith.constant 0 : i32
    return %c0_i32, %c0_i32_0 : i32, i32
  }
  func.func @transform_4(%arg0: i32, %arg1: i32) -> (i32, i32) {
    %c0_i32 = arith.constant 0 : i32
    %c0_i32_0 = arith.constant 0 : i32
    %c0_i32_1 = arith.constant 0 : i32
    return %c0_i32, %c0_i32_0 : i32, i32
  }
  func.func @transform_5(%arg0: i32, %arg1: i32) -> (i32, i32, i32) {
    %c0_i32 = arith.constant 0 : i32
    %c0_i32_0 = arith.constant 0 : i32
    return %arg0, %c0_i32, %arg1 : i32, i32, i32
  }
}

</mosaic_0001>

<llo_original>
// kernel: tpu_custom_call.1
$region0: #{tpu_custom_call.1}
  #allocation0 [shape = 'u32[]', space=smem, size = 0x4, offset = 0x4, fixed_abs, tag = 'smem constant byte address 0x4 - core index']
  #allocation1 [shape = 'u32[72,128]{1,0:T(1,128)}', space=vmem, size = 0x9000, scoped, tag = 'internal scratch']
  %s0 = inlined_call_operand.vmem [shape: f32[2,4,512], index: 0, kind: input, shape index: {}]
  %s1 = inlined_call_operand.vmem [shape: f32[2,4,512], index: 1, kind: input, shape index: {}]
  %s2 = inlined_call_operand.vmem [shape: f32[9,8,4], index: 2, kind: input, shape index: {}]
  %s3 = inlined_call_operand.vmem [shape: f32[8,1], index: 3, kind: input, shape index: {}]
  %s4 = inlined_call_operand.vmem [shape: f32[4,8], index: 4, kind: input, shape index: {}]
  %s5 = inlined_call_operand.hbm [shape: f32[2,4,384], index: 5, kind: output, shape index: {}]
  %s6 = sld [smem:[#allocation0]]
  $region53: #{tpu_custom_call.1} parent=0
    _
  %s8 = ssub.s32 1, %s6
  %s9 = scalar_select 0, %s8, %s6
  $region1: #{tpu_custom_call.1} parent=0
    #allocation2 [shape = 'u8[12288]{0}', space=vmem, size = 0x3000, scoped, tag = 'output window, operand 0']
    #allocation3 [shape = 's32[2]{0}', space=sflag, size = 0x8, scoped, tag = 'scoped memory for tpu_custom_call.1']
    %10 = vsyncpa [#allocation3], 0
    %s11 = scalar_lea.sflag [#allocation3], 1
    %12 = vsyncpa %s11, 0
    loop: start=0, step=1, limit=4
    $region2: #{tpu_custom_call.1} parent=1 // loop_pre_header
      _
    $region3: #{tpu_custom_call.1} parent=1 // loop_header
      %s14 = sphi 0, %s18
      %p15 = scmp.ge.s32.totalorder %s14, 4
      %s21 = sphi 0, %s33
      %s22 = sphi 0, %s29
      %s23 = sphi 0, %s21
      %s24 = sphi 0, %s22
      %s25 = sphi 0, %s23
      %s26 = sphi 0, %s24
      %s38 = sphi 0, %s40
      %s41 = sphi 0, %s38
      %s42 = sphi 0, %s41
      %s58 = sphi 0, %s42
      %s70 = sphi 0, %s72
      %s73 = sphi 0, %s70
      %s74 = sphi 0, %s73
      %s90 = sphi 0, %s74
      %s94 = sphi 0, %s94
      %s96 = sphi 0, %s94
      %s97 = sphi 0, %s96
      %s111 = sphi 0, %s97
      %s115 = sphi 0, %s115
      %s117 = sphi 0, %s115
      %s118 = sphi 0, %s117
      %s132 = sphi 0, %s118
      %s136 = sphi 0, %s136
      %s138 = sphi 0, %s136
      %s139 = sphi 0, %s138
      %s153 = sphi 0, %s139
      %s161 = sphi 0, %s163
      %s164 = sphi 0, %s161
      %s165 = sphi 0, %s164
      %s181 = sphi 0, %s165
    $region4: #{tpu_custom_call.1} parent=1 // loop_header_branch
      %17 = sbr.rel (%p15) target = $region8
    $region5: #{tpu_custom_call.1} parent=1 // loop_body
      %s19 = ssub.s32 %s14, 1
      %s20 = ssub.s32 %s14, 2
      %s27 = sadd.s32 1, %s22
      %p28 = scmp.ge.s32.totalorder %s27, 1
      %s29 = scalar_select %p28, 0, %s27
      %s30 = sadd.s32 1, %s21
      %s31 = scalar_select %p28, %s30, %s21
      %p32 = scmp.ge.s32.totalorder %s31, 2
      %s33 = scalar_select %p32, 0, %s31
      %s34 = ssub.s32 %s21, %s33
      %s35 = ssub.s32 %s22, %s29
      %s36 = sor.u32 %s34, %s35
      %p37 = scmp.eq.s32.totalorder %s36, 0
      %s39 = sadd.s32 %s38, 1
      %s40 = scalar_select %p37, %s38, %s39
      %p43 = pneg %p37
      %p44 = scmp.eq.s32.totalorder %s14, 1
      %p45 = por %p43, %p44
      %p46 = scmp.ne.s32.totalorder %s38, %s41
      %p47 = scmp.eq.s32.totalorder %s14, 0
      %p48 = por %p46, %p47
      %p49 = scmp.ne.s32.totalorder %s38, %s41
      %p50 = scmp.eq.s32.totalorder %s19, 1
      %p51 = por %p49, %p50
      %p52 = scmp.ne.s32.totalorder %s41, %s42
      %p53 = scmp.eq.s32.totalorder %s19, 0
      %p54 = por %p52, %p53
      %p55 = scmp.ne.s32.totalorder %s41, %s42
      %p56 = scmp.eq.s32.totalorder %s20, 1
      %p57 = por %p55, %p56
      %p59 = scmp.ne.s32.totalorder %s42, %s58
      %p60 = scmp.eq.s32.totalorder %s20, 0
      %p61 = por %p59, %p60
      %s62 = sadd.s32 %s22, 1
      %s63 = smul.u32 %s62, 3
      %s64 = sadd.s32 %s29, 1
      %s65 = smul.u32 %s64, 3
      %s66 = ssub.s32 %s21, %s33
      %s67 = ssub.s32 %s63, %s65
      %s68 = sor.u32 %s66, %s67
      %p69 = scmp.eq.s32.totalorder %s68, 0
      %s71 = sadd.s32 %s70, 1
      %s72 = scalar_select %p69, %s70, %s71
      %p75 = pneg %p69
      %p76 = scmp.eq.s32.totalorder %s14, 1
      %p77 = por %p75, %p76
      %p78 = scmp.ne.s32.totalorder %s70, %s73
      %p79 = scmp.eq.s32.totalorder %s14, 0
      %p80 = por %p78, %p79
      %p81 = scmp.ne.s32.totalorder %s70, %s73
      %p82 = scmp.eq.s32.totalorder %s19, 1
      %p83 = por %p81, %p82
      %p84 = scmp.ne.s32.totalorder %s73, %s74
      %p85 = scmp.eq.s32.totalorder %s19, 0
      %p86 = por %p84, %p85
      %p87 = scmp.ne.s32.totalorder %s73, %s74
      %p88 = scmp.eq.s32.totalorder %s20, 1
      %p89 = por %p87, %p88
      %p91 = scmp.ne.s32.totalorder %s74, %s90
      %p92 = scmp.eq.s32.totalorder %s20, 0
      %p93 = por %p91, %p92
      %s95 = sadd.s32 %s94, 1
      %p98 = scmp.eq.s32.totalorder %s14, 1
      %p99 = scmp.ne.s32.totalorder %s94, %s96
      %p100 = scmp.eq.s32.totalorder %s14, 0
      %p101 = por %p99, %p100
      %p102 = scmp.ne.s32.totalorder %s94, %s96
      %p103 = scmp.eq.s32.totalorder %s19, 1
      %p104 = por %p102, %p103
      %p105 = scmp.ne.s32.totalorder %s96, %s97
      %p106 = scmp.eq.s32.totalorder %s19, 0
      %p107 = por %p105, %p106
      %p108 = scmp.ne.s32.totalorder %s96, %s97
      %p109 = scmp.eq.s32.totalorder %s20, 1
      %p110 = por %p108, %p109
      %p112 = scmp.ne.s32.totalorder %s97, %s111
      %p113 = scmp.eq.s32.totalorder %s20, 0
      %p114 = por %p112, %p113
      %s116 = sadd.s32 %s115, 1
      %p119 = scmp.eq.s32.totalorder %s14, 1
      %p120 = scmp.ne.s32.totalorder %s115, %s117
      %p121 = scmp.eq.s32.totalorder %s14, 0
      %p122 = por %p120, %p121
      %p123 = scmp.ne.s32.totalorder %s115, %s117
      %p124 = scmp.eq.s32.totalorder %s19, 1
      %p125 = por %p123, %p124
      %p126 = scmp.ne.s32.totalorder %s117, %s118
      %p127 = scmp.eq.s32.totalorder %s19, 0
      %p128 = por %p126, %p127
      %p129 = scmp.ne.s32.totalorder %s117, %s118
      %p130 = scmp.eq.s32.totalorder %s20, 1
      %p131 = por %p129, %p130
      %p133 = scmp.ne.s32.totalorder %s118, %s132
      %p134 = scmp.eq.s32.totalorder %s20, 0
      %p135 = por %p133, %p134
      %s137 = sadd.s32 %s136, 1
      %p140 = scmp.eq.s32.totalorder %s14, 1
      %p141 = scmp.ne.s32.totalorder %s136, %s138
      %p142 = scmp.eq.s32.totalorder %s14, 0
      %p143 = por %p141, %p142
      %p144 = scmp.ne.s32.totalorder %s136, %s138
      %p145 = scmp.eq.s32.totalorder %s19, 1
      %p146 = por %p144, %p145
      %p147 = scmp.ne.s32.totalorder %s138, %s139
      %p148 = scmp.eq.s32.totalorder %s19, 0
      %p149 = por %p147, %p148
      %p150 = scmp.ne.s32.totalorder %s138, %s139
      %p151 = scmp.eq.s32.totalorder %s20, 1
      %p152 = por %p150, %p151
      %p154 = scmp.ne.s32.totalorder %s139, %s153
      %p155 = scmp.eq.s32.totalorder %s20, 0
      %p156 = por %p154, %p155
      %s157 = ssub.s32 %s21, %s33
      %s158 = ssub.s32 %s22, %s29
      %s159 = sor.u32 %s157, %s158
      %p160 = scmp.eq.s32.totalorder %s159, 0
      %s162 = sadd.s32 %s161, 1
      %s163 = scalar_select %p160, %s161, %s162
      %p166 = pneg %p160
      %p167 = scmp.eq.s32.totalorder %s14, 1
      %p168 = por %p166, %p167
      %p169 = scmp.ne.s32.totalorder %s161, %s164
      %p170 = scmp.eq.s32.totalorder %s14, 0
      %p171 = por %p169, %p170
      %p172 = scmp.ne.s32.totalorder %s161, %s164
      %p173 = scmp.eq.s32.totalorder %s19, 1
      %p174 = por %p172, %p173
      %p175 = scmp.ne.s32.totalorder %s164, %s165
      %p176 = scmp.eq.s32.totalorder %s19, 0
      %p177 = por %p175, %p176
      %p178 = scmp.ne.s32.totalorder %s164, %s165
      %p179 = scmp.eq.s32.totalorder %s20, 1
      %p180 = por %p178, %p179
      %p182 = scmp.ne.s32.totalorder %s165, %s181
      %p183 = scmp.eq.s32.totalorder %s20, 0
      %p184 = por %p182, %p183
      %p185 = scmp.le.s32.totalorder 1, %s14
      %p186 = scmp.lt.s32.totalorder %s14, 3
      %p187 = pnand %p185, %p186
      %p188 = pneg %p187
      // Predicated region
      $region9: #{tpu_custom_call.1} parent=5 // pred_check
        _
      $region10: #{tpu_custom_call.1} parent=5 // pred_check_branch
        %190 = sbr.rel (%p187) target = $region12
      $region11: #{tpu_custom_call.1} parent=5 // pred_region
        %s191 = ssub.s32 %s14, 1
        // Predicated region
        $region13: #{tpu_custom_call.1} parent=11 // pred_check
          %p192 = pneg %p107
        $region14: #{tpu_custom_call.1} parent=11 // pred_check_branch
          %194 = sbr.rel (%p192) target = $region16
        $region15: #{tpu_custom_call.1} parent=11 // pred_region
          _
        $region16: #{tpu_custom_call.1} parent=11 // pred_fallthru
          _
        // Predicated region
        $region17: #{tpu_custom_call.1} parent=11 // pred_check
          %p195 = pneg %p128
        $region18: #{tpu_custom_call.1} parent=11 // pred_check_branch
          %197 = sbr.rel (%p195) target = $region20
        $region19: #{tpu_custom_call.1} parent=11 // pred_region
          _
        $region20: #{tpu_custom_call.1} parent=11 // pred_fallthru
          _
        // Predicated region
        $region21: #{tpu_custom_call.1} parent=11 // pred_check
          %p198 = pneg %p149
        $region22: #{tpu_custom_call.1} parent=11 // pred_check_branch
          %200 = sbr.rel (%p198) target = $region24
        $region23: #{tpu_custom_call.1} parent=11 // pred_region
          _
        $region24: #{tpu_custom_call.1} parent=11 // pred_fallthru
          _
      $region12: #{tpu_custom_call.1} parent=5 // pred_fallthru
        _
      %p201 = scmp.lt.s32.totalorder %s14, 2
      // Predicated region
      $region25: #{tpu_custom_call.1} parent=5 // pred_check
        %p202 = pneg %p201
      $region26: #{tpu_custom_call.1} parent=5 // pred_check_branch
        %204 = sbr.rel (%p202) target = $region28
      $region27: #{tpu_custom_call.1} parent=5 // pred_region
        // Predicated region
        $region29: #{tpu_custom_call.1} parent=27 // pred_check
          %p205 = pneg %p48
        $region30: #{tpu_custom_call.1} parent=27 // pred_check_branch
          %207 = sbr.rel (%p205) target = $region32
        $region31: #{tpu_custom_call.1} parent=27 // pred_region
          %s208 = smul.u32 3, %s22
          %s209 = ssub.s32 4, %s208
          %p210 = scmp.lt.s32.totalorder %s209, 3
          %s211 = scalar_select %p210, %s209, 3
          %s212 = smul.u32 4, %s211
          %p213 = scmp.lt.s32.totalorder %s21, 1
          %s214 = scalar_select %p213, %s21, 1
          %p215 = scmp.lt.s32.totalorder %s208, 3
          %s216 = scalar_select %p215, %s208, 3
          %s217 = smul.addr %s214, 4
          %s218 = sadd.s32 %s216, %s217
          %s219 = smul.addr %s218, 4
          %s220 = scalar_lea.vmem %s0, %s219
          %s221 = smul.u32 3, %s22
          %s222 = ssub.s32 4, %s221
          %p223 = scmp.lt.s32.totalorder %s222, 3
          %s224 = scalar_select %p223, %s222, 3
          %s225 = smul.u32 4, %s224
        $region32: #{tpu_custom_call.1} parent=27 // pred_fallthru
          _
        // Predicated region
        $region33: #{tpu_custom_call.1} parent=27 // pred_check
          %p226 = pneg %p80
        $region34: #{tpu_custom_call.1} parent=27 // pred_check_branch
          %228 = sbr.rel (%p226) target = $region36
        $region35: #{tpu_custom_call.1} parent=27 // pred_region
          %s229 = sadd.s32 %s22, 1
          %s230 = smul.u32 %s229, 3
          %p231 = scmp.lt.s32.totalorder %s21, 1
          %s232 = scalar_select %p231, %s21, 1
          %p233 = scmp.lt.s32.totalorder %s230, 3
          %s234 = scalar_select %p233, %s230, 3
          %s235 = smul.addr %s232, 4
          %s236 = sadd.s32 %s234, %s235
          %s237 = smul.addr %s236, 4
          %s238 = scalar_lea.vmem %s1, %s237
          %s239 = sadd.s32 %s22, 1
          %s240 = smul.u32 %s239, 3
        $region36: #{tpu_custom_call.1} parent=27 // pred_fallthru
          _
      $region28: #{tpu_custom_call.1} parent=5 // pred_fallthru
        _
      %p241 = scmp.le.s32.totalorder 1, %s14
      %p242 = scmp.lt.s32.totalorder %s14, 3
      %p243 = pnand %p241, %p242
      %p244 = pneg %p243
      // Predicated region
      $region37: #{tpu_custom_call.1} parent=5 // pred_check
        _
      $region38: #{tpu_custom_call.1} parent=5 // pred_check_branch
        %246 = sbr.rel (%p243) target = $region40
      $region39: #{tpu_custom_call.1} parent=5 // pred_region
        %s247 = ssub.s32 %s14, 1
        %s248 = smul.u32 3, %s24
        %s249 = ssub.s32 4, %s248
        %p250 = scmp.lt.s32.totalorder %s249, 3
        %s251 = scalar_select %p250, %s249, 3
        %s252 = smul.u32 4, %s251
        %p253 = scmp.lt.s32.totalorder %s23, 1
        %s254 = scalar_select %p253, %s23, 1
        %p255 = scmp.lt.s32.totalorder %s248, 3
        %s256 = scalar_select %p255, %s248, 3
        %s257 = smul.addr %s254, 4
        %s258 = sadd.s32 %s256, %s257
        %s259 = smul.addr %s258, 4
        %s260 = scalar_lea.vmem %s0, %s259
        %p261 = pneg %p54
        %p262 = pneg %p51
        %s263 = sadd.s32 %s24, 1
        %s264 = smul.u32 %s263, 3
        %p265 = scmp.lt.s32.totalorder %s23, 1
        %s266 = scalar_select %p265, %s23, 1
        %p267 = scmp.lt.s32.totalorder %s264, 3
        %s268 = scalar_select %p267, %s264, 3
        %s269 = smul.addr %s266, 4
        %s270 = sadd.s32 %s268, %s269
        %s271 = smul.addr %s270, 4
        %s272 = scalar_lea.vmem %s1, %s271
        %p273 = pneg %p86
        %p274 = pneg %p83
        %p275 = pneg %p107
        %p276 = pneg %p104
        %p277 = pneg %p128
        %p278 = pneg %p125
        %p279 = pneg %p149
        %p280 = pneg %p146
        %p281 = pneg %p177
        %p282 = pneg %p174
        %s283 = sand.u32 %s164, 1
        %s284 = scalar_lea.sflag [#allocation3], %s283
        %s285 = sand.u32 %s164, 1
        %s286 = smul.addr %s285, 12
        %s287 = scalar_lea.vmem [#allocation2], %s286
        %s288 = smul.u32 3, %s24
        %s289 = ssub.s32 4, %s288
        %p290 = scmp.lt.s32.totalorder %s289, 3
        %s291 = scalar_select %p290, %s289, 3
        %s292 = smul.u32 4, %s291
        %p293 = scmp.lt.s32.totalorder %s23, 1
        %s294 = scalar_select %p293, %s23, 1
        %p295 = scmp.lt.s32.totalorder %s288, 3
        %s296 = scalar_select %p295, %s288, 3
        %s297 = smul.addr %s294, 4
        %s298 = sadd.s32 %s296, %s297
        %s299 = smul.addr %s298, 4
        %s300 = scalar_lea.vmem %s0, %s299
        %s301 = smul.u32 3, %s24
        %s302 = ssub.s32 4, %s301
        %p303 = scmp.lt.s32.totalorder %s302, 3
        %s304 = scalar_select %p303, %s302, 3
        %s305 = smul.u32 4, %s304
        %s306 = sadd.s32 %s24, 1
        %s307 = smul.u32 %s306, 3
        %p308 = scmp.lt.s32.totalorder %s23, 1
        %s309 = scalar_select %p308, %s23, 1
        %p310 = scmp.lt.s32.totalorder %s307, 3
        %s311 = scalar_select %p310, %s307, 3
        %s312 = smul.addr %s309, 4
        %s313 = sadd.s32 %s311, %s312
        %s314 = smul.addr %s313, 4
        %s315 = scalar_lea.vmem %s1, %s314
        %s316 = sadd.s32 %s24, 1
        %s317 = smul.u32 %s316, 3
        %s318 = smul.u32 3, %s24
        %v319 = vld [vmem:[%s300] sm:$0xff]
        %v320 = vld [vmem:[%s300 + $0x8] sm:$0xf]
        %v321 = vld [vmem:[%s315] sm:$0xf]
        %324 = vst [vmem:[#allocation1] ss:$2 sm:$0xff] %v319
        %s325 = scalar_lea.vmem [#allocation1], 16
        %326 = vst [vmem:[%s325] ss:$2 sm:$0xff] %v320
        %v327 = vld.sshfl [vmem:[#allocation1] sm:$0xff pattern:$0x75316420]
        %v328 = vld.sshfl [vmem:[#allocation1 + $0x8] sm:$0xff pattern:$0x75316420]
        %v329 = vld.sshfl [vmem:[#allocation1 + $0x10] sm:$0xff pattern:$0x75316420]
        %v330 = vld [vmem:[%s2] sm:$0xff]
        %s331 = scalar_lea.vmem %s2, 8
        %v332 = vld [vmem:[%s331] sm:$0xff]
        %334 = vrot.lane.b32.xlu0 %v327, 127
        %v335 = vpop.permute.xlu0 %334
        %336 = vrot.lane.b32.xlu0 %v328, 127
        %v337 = vpop.permute.xlu0 %336
        %338 = vrot.lane.b32.xlu0 %v329, 127
        %v339 = vpop.permute.xlu0 %338
        %340 = vrot.lane.b32.xlu0 %v321, 127
        %v341 = vpop.permute.xlu0 %340
        %vm342 = vcmask 1039360
        %v343 = vsel %vm342, %v335, %v337
        %v344 = vsel %vm342, %v337, %v339
        %v345 = vsel %vm342, %v339, %v341
        %vm346 = vcmask 31744
        %v348 = vsel %vm346, %v332, 0
        %vm350 = vcmask 1043456
        %v351 = vsel %vm350, %v343, 0
        %v353 = vsel %vm350, %v344, 0
        %v355 = vsel %vm350, %v345, 0
        %357 = vmatpush.msra.mxu0 0.0
        %358 = vmatpush.msra.mxu0 0.0
        %359 = vmatpush.msra.mxu0 0.0
        %360 = vmatpush.msra.mxu0 0.0
        %361 = vmatpush.msra.mxu0 0.0
        %362 = vmatpush.msra.mxu0 0.0
        %363 = vmatpush.msra.mxu0 0.0
        %364 = vmatpush.msra.mxu0 0.0
        %365 = vmatpush.msra.mxu0 0.0
        %366 = vmatpush.msra.mxu0 0.0
        %367 = vmatpush.msra.mxu0 0.0
        %368 = vmatpush.msra.mxu0 0.0
        %369 = vmatpush.msra.mxu0 0.0
        %370 = vmatpush.msra.mxu0 0.0
        %371 = vmatpush.msra.mxu0 0.0
        %372 = vmatpush.msra.mxu0 %v351
        %373 = vmatmul.f32.gmra.mxu0 %v348
        %v374 = vpop.f32.mrf.mxu0
        %v375 = vadd.f32 0.0, %v374
        %376 = vdwg.mxu0
        %377 = vmatpush.msra.mxu0 0.0
        %378 = vmatpush.msra.mxu0 0.0
        %379 = vmatpush.msra.mxu0 0.0
        %380 = vmatpush.msra.mxu0 0.0
        %381 = vmatpush.msra.mxu0 0.0
        %382 = vmatpush.msra.mxu0 0.0
        %383 = vmatpush.msra.mxu0 0.0
        %384 = vmatpush.msra.mxu0 0.0
        %385 = vmatpush.msra.mxu0 0.0
        %386 = vmatpush.msra.mxu0 0.0
        %387 = vmatpush.msra.mxu0 0.0
        %388 = vmatpush.msra.mxu0 0.0
        %389 = vmatpush.msra.mxu0 0.0
        %390 = vmatpush.msra.mxu0 0.0
        %391 = vmatpush.msra.mxu0 0.0
        %392 = vmatpush.msra.mxu0 %v353
        %393 = vmatmul.f32.gmra.mxu0 %v348
        %v394 = vpop.f32.mrf.mxu0
        %v395 = vadd.f32 0.0, %v394
        %396 = vdwg.mxu0
        %397 = vmatpush.msra.mxu0 0.0
        %398 = vmatpush.msra.mxu0 0.0
        %399 = vmatpush.msra.mxu0 0.0
        %400 = vmatpush.msra.mxu0 0.0
        %401 = vmatpush.msra.mxu0 0.0
        %402 = vmatpush.msra.mxu0 0.0
        %403 = vmatpush.msra.mxu0 0.0
        %404 = vmatpush.msra.mxu0 0.0
        %405 = vmatpush.msra.mxu0 0.0
        %406 = vmatpush.msra.mxu0 0.0
        %407 = vmatpush.msra.mxu0 0.0
        %408 = vmatpush.msra.mxu0 0.0
        %409 = vmatpush.msra.mxu0 0.0
        %410 = vmatpush.msra.mxu0 0.0
        %411 = vmatpush.msra.mxu0 0.0
        %412 = vmatpush.msra.mxu0 %v355
        %413 = vmatmul.f32.gmra.mxu0 %v348
        %v414 = vpop.f32.mrf.mxu0
        %v415 = vadd.f32 0.0, %v414
        %416 = vdwg.mxu0
        %v418 = vsel %vm346, %v330, 0
        %v420 = vsel %vm350, %v327, 0
        %v422 = vsel %vm350, %v328, 0
        %v424 = vsel %vm350, %v329, 0
        %426 = vmatpush.msra.mxu0 0.0
        %427 = vmatpush.msra.mxu0 0.0
        %428 = vmatpush.msra.mxu0 0.0
        %429 = vmatpush.msra.mxu0 0.0
        %430 = vmatpush.msra.mxu0 0.0
        %431 = vmatpush.msra.mxu0 0.0
        %432 = vmatpush.msra.mxu0 0.0
        %433 = vmatpush.msra.mxu0 0.0
        %434 = vmatpush.msra.mxu0 0.0
        %435 = vmatpush.msra.mxu0 0.0
        %436 = vmatpush.msra.mxu0 0.0
        %437 = vmatpush.msra.mxu0 0.0
        %438 = vmatpush.msra.mxu0 0.0
        %439 = vmatpush.msra.mxu0 0.0
        %440 = vmatpush.msra.mxu0 0.0
        %441 = vmatpush.msra.mxu0 %v420
        %442 = vmatmul.f32.gmra.mxu0 %v418
        %v443 = vpop.f32.mrf.mxu0
        %v444 = vadd.f32 %v375, %v443
        %445 = vdwg.mxu0
        %446 = vmatpush.msra.mxu0 0.0
        %447 = vmatpush.msra.mxu0 0.0
        %448 = vmatpush.msra.mxu0 0.0
        %449 = vmatpush.msra.mxu0 0.0
        %450 = vmatpush.msra.mxu0 0.0
        %451 = vmatpush.msra.mxu0 0.0
        %452 = vmatpush.msra.mxu0 0.0
        %453 = vmatpush.msra.mxu0 0.0
        %454 = vmatpush.msra.mxu0 0.0
        %455 = vmatpush.msra.mxu0 0.0
        %456 = vmatpush.msra.mxu0 0.0
        %457 = vmatpush.msra.mxu0 0.0
        %458 = vmatpush.msra.mxu0 0.0
        %459 = vmatpush.msra.mxu0 0.0
        %460 = vmatpush.msra.mxu0 0.0
        %461 = vmatpush.msra.mxu0 %v422
        %462 = vmatmul.f32.gmra.mxu0 %v418
        %v463 = vpop.f32.mrf.mxu0
        %v464 = vadd.f32 %v395, %v463
        %465 = vdwg.mxu0
        %466 = vmatpush.msra.mxu0 0.0
        %467 = vmatpush.msra.mxu0 0.0
        %468 = vmatpush.msra.mxu0 0.0
        %469 = vmatpush.msra.mxu0 0.0
        %470 = vmatpush.msra.mxu0 0.0
        %471 = vmatpush.msra.mxu0 0.0
        %472 = vmatpush.msra.mxu0 0.0
        %473 = vmatpush.msra.mxu0 0.0
        %474 = vmatpush.msra.mxu0 0.0
        %475 = vmatpush.msra.mxu0 0.0
        %476 = vmatpush.msra.mxu0 0.0
        %477 = vmatpush.msra.mxu0 0.0
        %478 = vmatpush.msra.mxu0 0.0
        %479 = vmatpush.msra.mxu0 0.0
        %480 = vmatpush.msra.mxu0 0.0
        %481 = vmatpush.msra.mxu0 %v424
        %482 = vmatmul.f32.gmra.mxu0 %v418
        %v483 = vpop.f32.mrf.mxu0
        %v484 = vadd.f32 %v415, %v483
        %485 = vdwg.mxu0
        %s486 = scalar_lea.vmem %s2, 16
        %v487 = vld [vmem:[%s486] sm:$0xff]
        %488 = vrot.lane.b32.xlu0 %v327, 126
        %v489 = vpop.permute.xlu0 %488
        %490 = vrot.lane.b32.xlu0 %v328, 126
        %v491 = vpop.permute.xlu0 %490
        %492 = vrot.lane.b32.xlu0 %v329, 126
        %v493 = vpop.permute.xlu0 %492
        %494 = vrot.lane.b32.xlu0 %v321, 126
        %v495 = vpop.permute.xlu0 %494
        %vm496 = vcmask 1031168
        %v497 = vsel %vm496, %v489, %v491
        %v498 = vsel %vm496, %v491, %v493
        %v499 = vsel %vm496, %v493, %v495
        %v501 = vsel %vm346, %v487, 0
        %v503 = vsel %vm350, %v497, 0
        %v505 = vsel %vm350, %v498, 0
        %v507 = vsel %vm350, %v499, 0
        %509 = vmatpush.msra.mxu0 0.0
        %510 = vmatpush.msra.mxu0 0.0
        %511 = vmatpush.msra.mxu0 0.0
        %512 = vmatpush.msra.mxu0 0.0
        %513 = vmatpush.msra.mxu0 0.0
        %514 = vmatpush.msra.mxu0 0.0
        %515 = vmatpush.msra.mxu0 0.0
        %516 = vmatpush.msra.mxu0 0.0
        %517 = vmatpush.msra.mxu0 0.0
        %518 = vmatpush.msra.mxu0 0.0
        %519 = vmatpush.msra.mxu0 0.0
        %520 = vmatpush.msra.mxu0 0.0
        %521 = vmatpush.msra.mxu0 0.0
        %522 = vmatpush.msra.mxu0 0.0
        %523 = vmatpush.msra.mxu0 0.0
        %524 = vmatpush.msra.mxu0 %v503
        %525 = vmatmul.f32.gmra.mxu0 %v501
        %v526 = vpop.f32.mrf.mxu0
        %v527 = vadd.f32 0.0, %v526
        %528 = vdwg.mxu0
        %529 = vmatpush.msra.mxu0 0.0
        %530 = vmatpush.msra.mxu0 0.0
        %531 = vmatpush.msra.mxu0 0.0
        %532 = vmatpush.msra.mxu0 0.0
        %533 = vmatpush.msra.mxu0 0.0
        %534 = vmatpush.msra.mxu0 0.0
        %535 = vmatpush.msra.mxu0 0.0
        %536 = vmatpush.msra.mxu0 0.0
        %537 = vmatpush.msra.mxu0 0.0
        %538 = vmatpush.msra.mxu0 0.0
        %539 = vmatpush.msra.mxu0 0.0
        %540 = vmatpush.msra.mxu0 0.0
        %541 = vmatpush.msra.mxu0 0.0
        %542 = vmatpush.msra.mxu0 0.0
        %543 = vmatpush.msra.mxu0 0.0
        %544 = vmatpush.msra.mxu0 %v505
        %545 = vmatmul.f32.gmra.mxu0 %v501
        %v546 = vpop.f32.mrf.mxu0
        %v547 = vadd.f32 0.0, %v546
        %548 = vdwg.mxu0
        %549 = vmatpush.msra.mxu0 0.0
        %550 = vmatpush.msra.mxu0 0.0
        %551 = vmatpush.msra.mxu0 0.0
        %552 = vmatpush.msra.mxu0 0.0
        %553 = vmatpush.msra.mxu0 0.0
        %554 = vmatpush.msra.mxu0 0.0
        %555 = vmatpush.msra.mxu0 0.0
        %556 = vmatpush.msra.mxu0 0.0
        %557 = vmatpush.msra.mxu0 0.0
        %558 = vmatpush.msra.mxu0 0.0
        %559 = vmatpush.msra.mxu0 0.0
        %560 = vmatpush.msra.mxu0 0.0
        %561 = vmatpush.msra.mxu0 0.0
        %562 = vmatpush.msra.mxu0 0.0
        %563 = vmatpush.msra.mxu0 0.0
        %564 = vmatpush.msra.mxu0 %v507
        %565 = vmatmul.f32.gmra.mxu0 %v501
        %v566 = vpop.f32.mrf.mxu0
        %v567 = vadd.f32 0.0, %v566
        %568 = vdwg.mxu0
        %v569 = vadd.f32 %v444, %v527
        %v570 = vadd.f32 %v464, %v547
        %v571 = vadd.f32 %v484, %v567
        %s572 = scalar_lea.vmem %s2, 24
        %v573 = vld [vmem:[%s572] sm:$0xff]
        %574 = vrot.lane.b32.xlu0 %v327, 110
        %v575 = vpop.permute.xlu0 %574
        %576 = vrot.lane.b32.xlu0 %v328, 110
        %v577 = vpop.permute.xlu0 %576
        %578 = vrot.lane.b32.xlu0 %v329, 110
        %v579 = vpop.permute.xlu0 %578
        %580 = vrot.lane.b32.xlu0 %v321, 110
        %v581 = vpop.permute.xlu0 %580
        %vm582 = vcmask 900096
        %v583 = vsel %vm582, %v575, %v577
        %v584 = vsel %vm582, %v577, %v579
        %v585 = vsel %vm582, %v579, %v581
        %v587 = vsel %vm346, %v573, 0
        %v589 = vsel %vm350, %v583, 0
        %v591 = vsel %vm350, %v584, 0
        %v593 = vsel %vm350, %v585, 0
        %595 = vmatpush.msra.mxu0 0.0
        %596 = vmatpush.msra.mxu0 0.0
        %597 = vmatpush.msra.mxu0 0.0
        %598 = vmatpush.msra.mxu0 0.0
        %599 = vmatpush.msra.mxu0 0.0
        %600 = vmatpush.msra.mxu0 0.0
        %601 = vmatpush.msra.mxu0 0.0
        %602 = vmatpush.msra.mxu0 0.0
        %603 = vmatpush.msra.mxu0 0.0
        %604 = vmatpush.msra.mxu0 0.0
        %605 = vmatpush.msra.mxu0 0.0
        %606 = vmatpush.msra.mxu0 0.0
        %607 = vmatpush.msra.mxu0 0.0
        %608 = vmatpush.msra.mxu0 0.0
        %609 = vmatpush.msra.mxu0 0.0
        %610 = vmatpush.msra.mxu0 %v589
        %611 = vmatmul.f32.gmra.mxu0 %v587
        %v612 = vpop.f32.mrf.mxu0
        %v613 = vadd.f32 0.0, %v612
        %614 = vdwg.mxu0
        %615 = vmatpush.msra.mxu0 0.0
        %616 = vmatpush.msra.mxu0 0.0
        %617 = vmatpush.msra.mxu0 0.0
        %618 = vmatpush.msra.mxu0 0.0
        %619 = vmatpush.msra.mxu0 0.0
        %620 = vmatpush.msra.mxu0 0.0
        %621 = vmatpush.msra.mxu0 0.0
        %622 = vmatpush.msra.mxu0 0.0
        %623 = vmatpush.msra.mxu0 0.0
        %624 = vmatpush.msra.mxu0 0.0
        %625 = vmatpush.msra.mxu0 0.0
        %626 = vmatpush.msra.mxu0 0.0
        %627 = vmatpush.msra.mxu0 0.0
        %628 = vmatpush.msra.mxu0 0.0
        %629 = vmatpush.msra.mxu0 0.0
        %630 = vmatpush.msra.mxu0 %v591
        %631 = vmatmul.f32.gmra.mxu0 %v587
        %v632 = vpop.f32.mrf.mxu0
        %v633 = vadd.f32 0.0, %v632
        %634 = vdwg.mxu0
        %635 = vmatpush.msra.mxu0 0.0
        %636 = vmatpush.msra.mxu0 0.0
        %637 = vmatpush.msra.mxu0 0.0
        %638 = vmatpush.msra.mxu0 0.0
        %639 = vmatpush.msra.mxu0 0.0
        %640 = vmatpush.msra.mxu0 0.0
        %641 = vmatpush.msra.mxu0 0.0
        %642 = vmatpush.msra.mxu0 0.0
        %643 = vmatpush.msra.mxu0 0.0
        %644 = vmatpush.msra.mxu0 0.0
        %645 = vmatpush.msra.mxu0 0.0
        %646 = vmatpush.msra.mxu0 0.0
        %647 = vmatpush.msra.mxu0 0.0
        %648 = vmatpush.msra.mxu0 0.0
        %649 = vmatpush.msra.mxu0 0.0
        %650 = vmatpush.msra.mxu0 %v593
        %651 = vmatmul.f32.gmra.mxu0 %v587
        %v652 = vpop.f32.mrf.mxu0
        %v653 = vadd.f32 0.0, %v652
        %654 = vdwg.mxu0
        %v655 = vadd.f32 %v569, %v613
        %v656 = vadd.f32 %v570, %v633
        %v657 = vadd.f32 %v571, %v653
        %s658 = scalar_lea.vmem %s2, 32
        %v659 = vld [vmem:[%s658] sm:$0xff]
        %660 = vrot.lane.b32.xlu0 %v327, 109
        %v661 = vpop.permute.xlu0 %660
        %662 = vrot.lane.b32.xlu0 %v328, 109
        %v663 = vpop.permute.xlu0 %662
        %664 = vrot.lane.b32.xlu0 %v329, 109
        %v665 = vpop.permute.xlu0 %664
        %666 = vrot.lane.b32.xlu0 %v321, 109
        %v667 = vpop.permute.xlu0 %666
        %vm668 = vcmask 891904
        %v669 = vsel %vm668, %v661, %v663
        %v670 = vsel %vm668, %v663, %v665
        %v671 = vsel %vm668, %v665, %v667
        %v673 = vsel %vm346, %v659, 0
        %v675 = vsel %vm350, %v669, 0
        %v677 = vsel %vm350, %v670, 0
        %v679 = vsel %vm350, %v671, 0
        %681 = vmatpush.msra.mxu0 0.0
        %682 = vmatpush.msra.mxu0 0.0
        %683 = vmatpush.msra.mxu0 0.0
        %684 = vmatpush.msra.mxu0 0.0
        %685 = vmatpush.msra.mxu0 0.0
        %686 = vmatpush.msra.mxu0 0.0
        %687 = vmatpush.msra.mxu0 0.0
        %688 = vmatpush.msra.mxu0 0.0
        %689 = vmatpush.msra.mxu0 0.0
        %690 = vmatpush.msra.mxu0 0.0
        %691 = vmatpush.msra.mxu0 0.0
        %692 = vmatpush.msra.mxu0 0.0
        %693 = vmatpush.msra.mxu0 0.0
        %694 = vmatpush.msra.mxu0 0.0
        %695 = vmatpush.msra.mxu0 0.0
        %696 = vmatpush.msra.mxu0 %v675
        %697 = vmatmul.f32.gmra.mxu0 %v673
        %v698 = vpop.f32.mrf.mxu0
        %v699 = vadd.f32 0.0, %v698
        %700 = vdwg.mxu0
        %701 = vmatpush.msra.mxu0 0.0
        %702 = vmatpush.msra.mxu0 0.0
        %703 = vmatpush.msra.mxu0 0.0
        %704 = vmatpush.msra.mxu0 0.0
        %705 = vmatpush.msra.mxu0 0.0
        %706 = vmatpush.msra.mxu0 0.0
        %707 = vmatpush.msra.mxu0 0.0
        %708 = vmatpush.msra.mxu0 0.0
        %709 = vmatpush.msra.mxu0 0.0
        %710 = vmatpush.msra.mxu0 0.0
        %711 = vmatpush.msra.mxu0 0.0
        %712 = vmatpush.msra.mxu0 0.0
        %713 = vmatpush.msra.mxu0 0.0
        %714 = vmatpush.msra.mxu0 0.0
        %715 = vmatpush.msra.mxu0 0.0
        %716 = vmatpush.msra.mxu0 %v677
        %717 = vmatmul.f32.gmra.mxu0 %v673
        %v718 = vpop.f32.mrf.mxu0
        %v719 = vadd.f32 0.0, %v718
        %720 = vdwg.mxu0
        %721 = vmatpush.msra.mxu0 0.0
        %722 = vmatpush.msra.mxu0 0.0
        %723 = vmatpush.msra.mxu0 0.0
        %724 = vmatpush.msra.mxu0 0.0
        %725 = vmatpush.msra.mxu0 0.0
        %726 = vmatpush.msra.mxu0 0.0
        %727 = vmatpush.msra.mxu0 0.0
        %728 = vmatpush.msra.mxu0 0.0
        %729 = vmatpush.msra.mxu0 0.0
        %730 = vmatpush.msra.mxu0 0.0
        %731 = vmatpush.msra.mxu0 0.0
        %732 = vmatpush.msra.mxu0 0.0
        %733 = vmatpush.msra.mxu0 0.0
        %734 = vmatpush.msra.mxu0 0.0
        %735 = vmatpush.msra.mxu0 0.0
        %736 = vmatpush.msra.mxu0 %v679
        %737 = vmatmul.f32.gmra.mxu0 %v673
        %v738 = vpop.f32.mrf.mxu0
        %v739 = vadd.f32 0.0, %v738
        %740 = vdwg.mxu0
        %v741 = vadd.f32 %v655, %v699
        %v742 = vadd.f32 %v656, %v719
        %v743 = vadd.f32 %v657, %v739
        %s744 = scalar_lea.vmem %s2, 40
        %v745 = vld [vmem:[%s744] sm:$0xff]
        %746 = vrot.lane.b32.xlu0 %v327, 108
        %v747 = vpop.permute.xlu0 %746
        %748 = vrot.lane.b32.xlu0 %v328, 108
        %v749 = vpop.permute.xlu0 %748
        %750 = vrot.lane.b32.xlu0 %v329, 108
        %v751 = vpop.permute.xlu0 %750
        %752 = vrot.lane.b32.xlu0 %v321, 108
        %v753 = vpop.permute.xlu0 %752
        %vm754 = vcmask 883712
        %v755 = vsel %vm754, %v747, %v749
        %v756 = vsel %vm754, %v749, %v751
        %v757 = vsel %vm754, %v751, %v753
        %v759 = vsel %vm346, %v745, 0
        %v761 = vsel %vm350, %v755, 0
        %v763 = vsel %vm350, %v756, 0
        %v765 = vsel %vm350, %v757, 0
        %767 = vmatpush.msra.mxu0 0.0
        %768 = vmatpush.msra.mxu0 0.0
        %769 = vmatpush.msra.mxu0 0.0
        %770 = vmatpush.msra.mxu0 0.0
        %771 = vmatpush.msra.mxu0 0.0
        %772 = vmatpush.msra.mxu0 0.0
        %773 = vmatpush.msra.mxu0 0.0
        %774 = vmatpush.msra.mxu0 0.0
        %775 = vmatpush.msra.mxu0 0.0
        %776 = vmatpush.msra.mxu0 0.0
        %777 = vmatpush.msra.mxu0 0.0
        %778 = vmatpush.msra.mxu0 0.0
        %779 = vmatpush.msra.mxu0 0.0
        %780 = vmatpush.msra.mxu0 0.0
        %781 = vmatpush.msra.mxu0 0.0
        %782 = vmatpush.msra.mxu0 %v761
        %783 = vmatmul.f32.gmra.mxu0 %v759
        %v784 = vpop.f32.mrf.mxu0
        %v785 = vadd.f32 0.0, %v784
        %786 = vdwg.mxu0
        %787 = vmatpush.msra.mxu0 0.0
        %788 = vmatpush.msra.mxu0 0.0
        %789 = vmatpush.msra.mxu0 0.0
        %790 = vmatpush.msra.mxu0 0.0
        %791 = vmatpush.msra.mxu0 0.0
        %792 = vmatpush.msra.mxu0 0.0
        %793 = vmatpush.msra.mxu0 0.0
        %794 = vmatpush.msra.mxu0 0.0
        %795 = vmatpush.msra.mxu0 0.0
        %796 = vmatpush.msra.mxu0 0.0
        %797 = vmatpush.msra.mxu0 0.0
        %798 = vmatpush.msra.mxu0 0.0
        %799 = vmatpush.msra.mxu0 0.0
        %800 = vmatpush.msra.mxu0 0.0
        %801 = vmatpush.msra.mxu0 0.0
        %802 = vmatpush.msra.mxu0 %v763
        %803 = vmatmul.f32.gmra.mxu0 %v759
        %v804 = vpop.f32.mrf.mxu0
        %v805 = vadd.f32 0.0, %v804
        %806 = vdwg.mxu0
        %807 = vmatpush.msra.mxu0 0.0
        %808 = vmatpush.msra.mxu0 0.0
        %809 = vmatpush.msra.mxu0 0.0
        %810 = vmatpush.msra.mxu0 0.0
        %811 = vmatpush.msra.mxu0 0.0
        %812 = vmatpush.msra.mxu0 0.0
        %813 = vmatpush.msra.mxu0 0.0
        %814 = vmatpush.msra.mxu0 0.0
        %815 = vmatpush.msra.mxu0 0.0
        %816 = vmatpush.msra.mxu0 0.0
        %817 = vmatpush.msra.mxu0 0.0
        %818 = vmatpush.msra.mxu0 0.0
        %819 = vmatpush.msra.mxu0 0.0
        %820 = vmatpush.msra.mxu0 0.0
        %821 = vmatpush.msra.mxu0 0.0
        %822 = vmatpush.msra.mxu0 %v765
        %823 = vmatmul.f32.gmra.mxu0 %v759
        %v824 = vpop.f32.mrf.mxu0
        %v825 = vadd.f32 0.0, %v824
        %826 = vdwg.mxu0
        %v827 = vadd.f32 %v741, %v785
        %v828 = vadd.f32 %v742, %v805
        %v829 = vadd.f32 %v743, %v825
        %s830 = scalar_lea.vmem %s2, 48
        %v831 = vld [vmem:[%s830] sm:$0xff]
        %832 = vrot.lane.b32.xlu0 %v327, 92
        %v833 = vpop.permute.xlu0 %832
        %834 = vrot.lane.b32.xlu0 %v328, 92
        %v835 = vpop.permute.xlu0 %834
        %836 = vrot.lane.b32.xlu0 %v329, 92
        %v837 = vpop.permute.xlu0 %836
        %838 = vrot.lane.b32.xlu0 %v321, 92
        %v839 = vpop.permute.xlu0 %838
        %vm840 = vcmask 752640
        %v841 = vsel %vm840, %v833, %v835
        %v842 = vsel %vm840, %v835, %v837
        %v843 = vsel %vm840, %v837, %v839
        %v845 = vsel %vm346, %v831, 0
        %v847 = vsel %vm350, %v841, 0
        %v849 = vsel %vm350, %v842, 0
        %v851 = vsel %vm350, %v843, 0
        %853 = vmatpush.msra.mxu0 0.0
        %854 = vmatpush.msra.mxu0 0.0
        %855 = vmatpush.msra.mxu0 0.0
        %856 = vmatpush.msra.mxu0 0.0
        %857 = vmatpush.msra.mxu0 0.0
        %858 = vmatpush.msra.mxu0 0.0
        %859 = vmatpush.msra.mxu0 0.0
        %860 = vmatpush.msra.mxu0 0.0
        %861 = vmatpush.msra.mxu0 0.0
        %862 = vmatpush.msra.mxu0 0.0
        %863 = vmatpush.msra.mxu0 0.0
        %864 = vmatpush.msra.mxu0 0.0
        %865 = vmatpush.msra.mxu0 0.0
        %866 = vmatpush.msra.mxu0 0.0
        %867 = vmatpush.msra.mxu0 0.0
        %868 = vmatpush.msra.mxu0 %v847
        %869 = vmatmul.f32.gmra.mxu0 %v845
        %v870 = vpop.f32.mrf.mxu0
        %v871 = vadd.f32 0.0, %v870
        %872 = vdwg.mxu0
        %873 = vmatpush.msra.mxu0 0.0
        %874 = vmatpush.msra.mxu0 0.0
        %875 = vmatpush.msra.mxu0 0.0
        %876 = vmatpush.msra.mxu0 0.0
        %877 = vmatpush.msra.mxu0 0.0
        %878 = vmatpush.msra.mxu0 0.0
        %879 = vmatpush.msra.mxu0 0.0
        %880 = vmatpush.msra.mxu0 0.0
        %881 = vmatpush.msra.mxu0 0.0
        %882 = vmatpush.msra.mxu0 0.0
        %883 = vmatpush.msra.mxu0 0.0
        %884 = vmatpush.msra.mxu0 0.0
        %885 = vmatpush.msra.mxu0 0.0
        %886 = vmatpush.msra.mxu0 0.0
        %887 = vmatpush.msra.mxu0 0.0
        %888 = vmatpush.msra.mxu0 %v849
        %889 = vmatmul.f32.gmra.mxu0 %v845
        %v890 = vpop.f32.mrf.mxu0
        %v891 = vadd.f32 0.0, %v890
        %892 = vdwg.mxu0
        %893 = vmatpush.msra.mxu0 0.0
        %894 = vmatpush.msra.mxu0 0.0
        %895 = vmatpush.msra.mxu0 0.0
        %896 = vmatpush.msra.mxu0 0.0
        %897 = vmatpush.msra.mxu0 0.0
        %898 = vmatpush.msra.mxu0 0.0
        %899 = vmatpush.msra.mxu0 0.0
        %900 = vmatpush.msra.mxu0 0.0
        %901 = vmatpush.msra.mxu0 0.0
        %902 = vmatpush.msra.mxu0 0.0
        %903 = vmatpush.msra.mxu0 0.0
        %904 = vmatpush.msra.mxu0 0.0
        %905 = vmatpush.msra.mxu0 0.0
        %906 = vmatpush.msra.mxu0 0.0
        %907 = vmatpush.msra.mxu0 0.0
        %908 = vmatpush.msra.mxu0 %v851
        %909 = vmatmul.f32.gmra.mxu0 %v845
        %v910 = vpop.f32.mrf.mxu0
        %v911 = vadd.f32 0.0, %v910
        %912 = vdwg.mxu0
        %v913 = vadd.f32 %v827, %v871
        %v914 = vadd.f32 %v828, %v891
        %v915 = vadd.f32 %v829, %v911
        %s916 = scalar_lea.vmem %s2, 56
        %v917 = vld [vmem:[%s916] sm:$0xff]
        %918 = vrot.lane.b32.xlu0 %v327, 91
        %v919 = vpop.permute.xlu0 %918
        %920 = vrot.lane.b32.xlu0 %v328, 91
        %v921 = vpop.permute.xlu0 %920
        %922 = vrot.lane.b32.xlu0 %v329, 91
        %v923 = vpop.permute.xlu0 %922
        %924 = vrot.lane.b32.xlu0 %v321, 91
        %v925 = vpop.permute.xlu0 %924
        %vm926 = vcmask 744448
        %v927 = vsel %vm926, %v919, %v921
        %v928 = vsel %vm926, %v921, %v923
        %v929 = vsel %vm926, %v923, %v925
        %v931 = vsel %vm346, %v917, 0
        %v933 = vsel %vm350, %v927, 0
        %v935 = vsel %vm350, %v928, 0
        %v937 = vsel %vm350, %v929, 0
        %939 = vmatpush.msra.mxu0 0.0
        %940 = vmatpush.msra.mxu0 0.0
        %941 = vmatpush.msra.mxu0 0.0
        %942 = vmatpush.msra.mxu0 0.0
        %943 = vmatpush.msra.mxu0 0.0
        %944 = vmatpush.msra.mxu0 0.0
        %945 = vmatpush.msra.mxu0 0.0
        %946 = vmatpush.msra.mxu0 0.0
        %947 = vmatpush.msra.mxu0 0.0
        %948 = vmatpush.msra.mxu0 0.0
        %949 = vmatpush.msra.mxu0 0.0
        %950 = vmatpush.msra.mxu0 0.0
        %951 = vmatpush.msra.mxu0 0.0
        %952 = vmatpush.msra.mxu0 0.0
        %953 = vmatpush.msra.mxu0 0.0
        %954 = vmatpush.msra.mxu0 %v933
        %955 = vmatmul.f32.gmra.mxu0 %v931
        %v956 = vpop.f32.mrf.mxu0
        %v957 = vadd.f32 0.0, %v956
        %958 = vdwg.mxu0
        %959 = vmatpush.msra.mxu0 0.0
        %960 = vmatpush.msra.mxu0 0.0
        %961 = vmatpush.msra.mxu0 0.0
        %962 = vmatpush.msra.mxu0 0.0
        %963 = vmatpush.msra.mxu0 0.0
        %964 = vmatpush.msra.mxu0 0.0
        %965 = vmatpush.msra.mxu0 0.0
        %966 = vmatpush.msra.mxu0 0.0
        %967 = vmatpush.msra.mxu0 0.0
        %968 = vmatpush.msra.mxu0 0.0
        %969 = vmatpush.msra.mxu0 0.0
        %970 = vmatpush.msra.mxu0 0.0
        %971 = vmatpush.msra.mxu0 0.0
        %972 = vmatpush.msra.mxu0 0.0
        %973 = vmatpush.msra.mxu0 0.0
        %974 = vmatpush.msra.mxu0 %v935
        %975 = vmatmul.f32.gmra.mxu0 %v931
        %v976 = vpop.f32.mrf.mxu0
        %v977 = vadd.f32 0.0, %v976
        %978 = vdwg.mxu0
        %979 = vmatpush.msra.mxu0 0.0
        %980 = vmatpush.msra.mxu0 0.0
        %981 = vmatpush.msra.mxu0 0.0
        %982 = vmatpush.msra.mxu0 0.0
        %983 = vmatpush.msra.mxu0 0.0
        %984 = vmatpush.msra.mxu0 0.0
        %985 = vmatpush.msra.mxu0 0.0
        %986 = vmatpush.msra.mxu0 0.0
        %987 = vmatpush.msra.mxu0 0.0
        %988 = vmatpush.msra.mxu0 0.0
        %989 = vmatpush.msra.mxu0 0.0
        %990 = vmatpush.msra.mxu0 0.0
        %991 = vmatpush.msra.mxu0 0.0
        %992 = vmatpush.msra.mxu0 0.0
        %993 = vmatpush.msra.mxu0 0.0
        %994 = vmatpush.msra.mxu0 %v937
        %995 = vmatmul.f32.gmra.mxu0 %v931
        %v996 = vpop.f32.mrf.mxu0
        %v997 = vadd.f32 0.0, %v996
        %998 = vdwg.mxu0
        %v999 = vadd.f32 %v913, %v957
        %v1000 = vadd.f32 %v914, %v977
        %v1001 = vadd.f32 %v915, %v997
        %s1002 = scalar_lea.vmem %s2, 64
        %v1003 = vld [vmem:[%s1002] sm:$0xff]
        %1004 = vrot.lane.b32.xlu0 %v327, 90
        %v1005 = vpop.permute.xlu0 %1004
        %1006 = vrot.lane.b32.xlu0 %v328, 90
        %v1007 = vpop.permute.xlu0 %1006
        %1008 = vrot.lane.b32.xlu0 %v329, 90
        %v1009 = vpop.permute.xlu0 %1008
        %1010 = vrot.lane.b32.xlu0 %v321, 90
        %v1011 = vpop.permute.xlu0 %1010
        %vm1012 = vcmask 736256
        %v1013 = vsel %vm1012, %v1005, %v1007
        %v1014 = vsel %vm1012, %v1007, %v1009
        %v1015 = vsel %vm1012, %v1009, %v1011
        %v1017 = vsel %vm346, %v1003, 0
        %v1019 = vsel %vm350, %v1013, 0
        %v1021 = vsel %vm350, %v1014, 0
        %v1023 = vsel %vm350, %v1015, 0
        %1025 = vmatpush.msra.mxu0 0.0
        %1026 = vmatpush.msra.mxu0 0.0
        %1027 = vmatpush.msra.mxu0 0.0
        %1028 = vmatpush.msra.mxu0 0.0
        %1029 = vmatpush.msra.mxu0 0.0
        %1030 = vmatpush.msra.mxu0 0.0
        %1031 = vmatpush.msra.mxu0 0.0
        %1032 = vmatpush.msra.mxu0 0.0
        %1033 = vmatpush.msra.mxu0 0.0
        %1034 = vmatpush.msra.mxu0 0.0
        %1035 = vmatpush.msra.mxu0 0.0
        %1036 = vmatpush.msra.mxu0 0.0
        %1037 = vmatpush.msra.mxu0 0.0
        %1038 = vmatpush.msra.mxu0 0.0
        %1039 = vmatpush.msra.mxu0 0.0
        %1040 = vmatpush.msra.mxu0 %v1019
        %1041 = vmatmul.f32.gmra.mxu0 %v1017
        %v1042 = vpop.f32.mrf.mxu0
        %v1043 = vadd.f32 0.0, %v1042
        %1044 = vdwg.mxu0
        %1045 = vmatpush.msra.mxu0 0.0
        %1046 = vmatpush.msra.mxu0 0.0
        %1047 = vmatpush.msra.mxu0 0.0
        %1048 = vmatpush.msra.mxu0 0.0
        %1049 = vmatpush.msra.mxu0 0.0
        %1050 = vmatpush.msra.mxu0 0.0
        %1051 = vmatpush.msra.mxu0 0.0
        %1052 = vmatpush.msra.mxu0 0.0
        %1053 = vmatpush.msra.mxu0 0.0
        %1054 = vmatpush.msra.mxu0 0.0
        %1055 = vmatpush.msra.mxu0 0.0
        %1056 = vmatpush.msra.mxu0 0.0
        %1057 = vmatpush.msra.mxu0 0.0
        %1058 = vmatpush.msra.mxu0 0.0
        %1059 = vmatpush.msra.mxu0 0.0
        %1060 = vmatpush.msra.mxu0 %v1021
        %1061 = vmatmul.f32.gmra.mxu0 %v1017
        %v1062 = vpop.f32.mrf.mxu0
        %v1063 = vadd.f32 0.0, %v1062
        %1064 = vdwg.mxu0
        %1065 = vmatpush.msra.mxu0 0.0
        %1066 = vmatpush.msra.mxu0 0.0
        %1067 = vmatpush.msra.mxu0 0.0
        %1068 = vmatpush.msra.mxu0 0.0
        %1069 = vmatpush.msra.mxu0 0.0
        %1070 = vmatpush.msra.mxu0 0.0
        %1071 = vmatpush.msra.mxu0 0.0
        %1072 = vmatpush.msra.mxu0 0.0
        %1073 = vmatpush.msra.mxu0 0.0
        %1074 = vmatpush.msra.mxu0 0.0
        %1075 = vmatpush.msra.mxu0 0.0
        %1076 = vmatpush.msra.mxu0 0.0
        %1077 = vmatpush.msra.mxu0 0.0
        %1078 = vmatpush.msra.mxu0 0.0
        %1079 = vmatpush.msra.mxu0 0.0
        %1080 = vmatpush.msra.mxu0 %v1023
        %1081 = vmatmul.f32.gmra.mxu0 %v1017
        %v1082 = vpop.f32.mrf.mxu0
        %v1083 = vadd.f32 0.0, %v1082
        %1084 = vdwg.mxu0
        %v1085 = vadd.f32 %v999, %v1043
        %v1086 = vadd.f32 %v1000, %v1063
        %v1087 = vadd.f32 %v1001, %v1083
        %v1088 = vld [vmem:[%s3] sm:$0xff]
        %1090 = vset.pattern.permute.xlu0 0
        %1091 = vperm.xlu0 %1090, %v1088
        %v1092 = vpop.permute.xlu0 %1091
        %v1094 = vadd.f32 %v1085, %v1092
        %v1095 = vadd.f32 %v1086, %v1092
        %v1096 = vadd.f32 %v1087, %v1092
        %v1097 = vmax.f32 %v1094, 0.0
        %v1098 = vmax.f32 %v1095, 0.0
        %v1099 = vmax.f32 %v1096, 0.0
        %v1100 = vld [vmem:[%s4] sm:$0xf]
        %vm1101 = vcmask 64512
        %v1103 = vsel %vm1101, %v1100, 0
        %1105 = vmatpush.msra.mxu0 0.0
        %1106 = vmatpush.msra.mxu0 0.0
        %1107 = vmatpush.msra.mxu0 0.0
        %1108 = vmatpush.msra.mxu0 0.0
        %1109 = vmatpush.msra.mxu0 0.0
        %1110 = vmatpush.msra.mxu0 0.0
        %1111 = vmatpush.msra.mxu0 0.0
        %1112 = vmatpush.msra.mxu0 0.0
        %1113 = vmatpush.msra.mxu0 0.0
        %1114 = vmatpush.msra.mxu0 0.0
        %1115 = vmatpush.msra.mxu0 0.0
        %1116 = vmatpush.msra.mxu0 0.0
        %1117 = vmatpush.msra.mxu0 0.0
        %1118 = vmatpush.msra.mxu0 0.0
        %1119 = vmatpush.msra.mxu0 0.0
        %1120 = vmatpush.msra.mxu0 %v1097
        %1121 = vmatmul.f32.gmra.mxu0 %v1103
        %v1122 = vpop.f32.mrf.mxu0
        %v1123 = vadd.f32 0.0, %v1122
        %1124 = vdwg.mxu0
        %1125 = vmatpush.msra.mxu0 0.0
        %1126 = vmatpush.msra.mxu0 0.0
        %1127 = vmatpush.msra.mxu0 0.0
        %1128 = vmatpush.msra.mxu0 0.0
        %1129 = vmatpush.msra.mxu0 0.0
        %1130 = vmatpush.msra.mxu0 0.0
        %1131 = vmatpush.msra.mxu0 0.0
        %1132 = vmatpush.msra.mxu0 0.0
        %1133 = vmatpush.msra.mxu0 0.0
        %1134 = vmatpush.msra.mxu0 0.0
        %1135 = vmatpush.msra.mxu0 0.0
        %1136 = vmatpush.msra.mxu0 0.0
        %1137 = vmatpush.msra.mxu0 0.0
        %1138 = vmatpush.msra.mxu0 0.0
        %1139 = vmatpush.msra.mxu0 0.0
        %1140 = vmatpush.msra.mxu0 %v1098
        %1141 = vmatmul.f32.gmra.mxu0 %v1103
        %v1142 = vpop.f32.mrf.mxu0
        %v1143 = vadd.f32 0.0, %v1142
        %1144 = vdwg.mxu0
        %1145 = vmatpush.msra.mxu0 0.0
        %1146 = vmatpush.msra.mxu0 0.0
        %1147 = vmatpush.msra.mxu0 0.0
        %1148 = vmatpush.msra.mxu0 0.0
        %1149 = vmatpush.msra.mxu0 0.0
        %1150 = vmatpush.msra.mxu0 0.0
        %1151 = vmatpush.msra.mxu0 0.0
        %1152 = vmatpush.msra.mxu0 0.0
        %1153 = vmatpush.msra.mxu0 0.0
        %1154 = vmatpush.msra.mxu0 0.0
        %1155 = vmatpush.msra.mxu0 0.0
        %1156 = vmatpush.msra.mxu0 0.0
        %1157 = vmatpush.msra.mxu0 0.0
        %1158 = vmatpush.msra.mxu0 0.0
        %1159 = vmatpush.msra.mxu0 0.0
        %1160 = vmatpush.msra.mxu0 %v1099
        %1161 = vmatmul.f32.gmra.mxu0 %v1103
        %v1162 = vpop.f32.mrf.mxu0
        %v1163 = vadd.f32 0.0, %v1162
        %1164 = vdwg.mxu0
        %v1167 = vrot.slane %v1143, 4
        %v1168 = vsel %vm350, %v1123, %v1167
        %1170 = vst [vmem:[%s287] sm:$0xff] %v1168
        %1171 = vst [vmem:[%s287 + $0x8] sm:$0xf] %v1163
        %s1172 = sand.u32 %s164, 1
        %s1173 = scalar_lea.sflag [#allocation3], %s1172
        %s1174 = sand.u32 %s164, 1
        %s1175 = smul.addr %s1174, 12
        %s1176 = scalar_lea.vmem [#allocation2], %s1175
        // Predicated region
        $region41: #{tpu_custom_call.1} parent=39 // pred_check
          %p1177 = pneg %p174
        $region42: #{tpu_custom_call.1} parent=39 // pred_check_branch
          %1179 = sbr.rel (%p1177) target = $region44
        $region43: #{tpu_custom_call.1} parent=39 // pred_region
          %s1180 = smul.u32 3, %s24
          %1182 = vsyncadd %s1173, 0
          %s1183 = smul.addr %s23, 3
          %s1184 = sadd.s32 %s1180, %s1183
          %s1185 = smul.addr %s1184, 4
          %s1186 = scalar_lea.hbm %s5, %s1185
          %s1188 = sshll.u32 %s1176, 4
          %s1189 = int_to_ptr.vmem [resolvable:$true] %s1188
          %s1190 = sshll.u32 %s1186, 4
          %s1191 = int_to_ptr.hbm [resolvable:$true] %s1190
          %1193 = dma.vmem_to_hbm [thread:$0]  %s1189, 192, %s1191, %s1173
        $region44: #{tpu_custom_call.1} parent=39 // pred_fallthru
          _
      $region40: #{tpu_custom_call.1} parent=5 // pred_fallthru
        _
      %p1194 = scmp.le.s32.totalorder 2, %s14
      // Predicated region
      $region45: #{tpu_custom_call.1} parent=5 // pred_check
        %p1195 = pneg %p1194
      $region46: #{tpu_custom_call.1} parent=5 // pred_check_branch
        %1197 = sbr.rel (%p1195) target = $region48
      $region47: #{tpu_custom_call.1} parent=5 // pred_region
        %s1198 = ssub.s32 %s14, 2
        // Predicated region
        $region49: #{tpu_custom_call.1} parent=47 // pred_check
          %p1199 = pneg %p180
        $region50: #{tpu_custom_call.1} parent=47 // pred_check_branch
          %1201 = sbr.rel (%p1199) target = $region52
        $region51: #{tpu_custom_call.1} parent=47 // pred_region
          %s1202 = sand.u32 %s165, 1
          %s1203 = scalar_lea.sflag [#allocation3], %s1202
          %s1204 = sand.u32 %s165, 1
          %s1205 = smul.addr %s1204, 12
          %s1206 = scalar_lea.vmem [#allocation2], %s1205
          %1208 = dma.done %s1203, 192
        $region52: #{tpu_custom_call.1} parent=47 // pred_fallthru
          _
      $region48: #{tpu_custom_call.1} parent=5 // pred_fallthru
        _
    $region6: #{tpu_custom_call.1} parent=1 // loop_footer
      %s18 = sadd.s32 1, %s14
    $region7: #{tpu_custom_call.1} parent=1 // loop_footer_branch
      %13 = sbr.rel target = $region3
    $region8: #{tpu_custom_call.1} parent=1 // loop_exit
      _
    %1209 = vsyncpa [#allocation3], 1
    %s1210 = scalar_lea.sflag [#allocation3], 1
    %1211 = vsyncpa %s1210, 1

</llo_original>
